<compile_context>
chip_gen: v6e
topology: v6e:2x2x1
jax: 0.10.0
libtpu: 0.0.40
codegen_flags: <defaults>
</compile_context>

<pallas_src>
import numpy as np
import jax
import jax.numpy as jnp
from jax import lax
from jax.experimental import pallas as pl
from jax.experimental.pallas import tpu as pltpu

# TODO(synk): on v5e the f32 gate should ideally be ~128 (weaker MXU); chip
# detection is kept out for simplicity.
_KRON_HW_IN_MAX_F32 = 256
_KRON_HW_IN_MAX_BF16 = 1024
_H_LOOP_UNROLL = 4
_SEP_CB_MAX = 64  # bounds the f32/dtype intermediate y = (cb*Hin, W2) scratch


# ---------------------------------------------------------------------------
# Host-side (NumPy) construction of the interpolation weights.
# ---------------------------------------------------------------------------
def _interp_matrix(in_size: int, out_size: int) -> np.ndarray:
    """align_corners=True bilinear interpolation matrix, shape (out_size, in_size)."""
    W = np.zeros((out_size, in_size), dtype=np.float32)
    if in_size == 1 or out_size == 1:
        W[:, 0] = 1.0
        return W
    idx = np.arange(out_size, dtype=np.float64)
    src = idx * (in_size - 1) / (out_size - 1)
    lo = np.clip(np.floor(src).astype(np.int64), 0, in_size - 1)
    hi = np.minimum(lo + 1, in_size - 1)
    w_hi = (src - lo).astype(np.float32)
    w_lo = 1.0 - w_hi
    for o in range(out_size):
        W[o, lo[o]] += w_lo[o]
        W[o, hi[o]] += w_hi[o]
    return W


def _placed_interp_matrix(in_size: int, up_size: int, final_size: int, offset: int) -> np.ndarray:
    """(final_size, in_size): upsample to up_size then place at row `offset`.

    Rows outside the placed window are zero (== zero padding).  Negative
    offsets / final_size < up_size crop, matching F.pad with negative pads.
    """
    base = _interp_matrix(in_size, up_size)
    out = np.zeros((final_size, in_size), dtype=np.float32)
    for r in range(final_size):
        s = r - offset
        if 0 <= s < up_size:
            out[r] = base[s]
    return out


# ---------------------------------------------------------------------------
# Small helpers.
# ---------------------------------------------------------------------------
def _round_up(x: int, m: int) -> int:
    return ((x + m - 1) // m) * m


def _vmem_limit_bytes() -> int:
    """Generation-aware scoped-VMEM limit (v5e/v6e: 128 MiB phys, v7x: 64 MiB)."""
    cap = 64 << 20  # conservative fallback (v7x physical VMEM)
    try:
        info = pltpu.get_tpu_info()
        cap = int(getattr(info, "vmem_capacity_bytes", cap))
    except Exception:
        pass
    return int(min(cap * 0.7, 100 * (1 << 20)))


def _weight_spec(block_shape, index_map):
    """Resident (constant-index) weight: single-buffer it (DMA'd exactly once)."""
    try:
        return pl.BlockSpec(block_shape, index_map, pipeline_mode=pl.Buffered(1))
    except TypeError:  # older BlockSpec signature without pipeline_mode
        return pl.BlockSpec(block_shape, index_map)


def _largest_div_mult8(c2: int, cap: int) -> int:
    """Largest multiple of 8 that divides c2 and is <= cap (>= 8)."""
    best = 8
    d = 8
    cap = max(8, cap)
    while d <= min(c2, cap):
        if c2 % d == 0:
            best = d
        d += 8
    return best


def _pick_cb(nc: int, per_row: int, fixed: int, budget: int) -> int:
    """Channel-rows per grid step for the non-fused fallback kernels."""
    cb = max(1, (budget - fixed) // max(per_row, 1))
    cb = min(cb, 1024, nc)
    if cb >= nc:
        cb = nc
        # Aim for >=2 grid steps so both v7x TensorCores get work; on v5e/v6e
        # (1 TC) the extra ~0.35us step is negligible.
        if nc >= 16:
            half = _round_up((nc + 1) // 2, 8)
            if half < nc:
                cb = half
    else:
        cb = max(8, (cb // 8) * 8)
        cb = min(cb, nc)  # never exceed the array extent (NC < 8 edge case)
    return int(cb)


# ---------------------------------------------------------------------------
# Kernels.
# ---------------------------------------------------------------------------
def _make_fused_kron_kernel(j2: int):
    """Fused concat + upsample; small spatial maps (single lane-dense GEMM)."""

    def kernel(x2_ref, x1_ref, wk_ref, o_ref):
        j = pl.program_id(1)

        @pl.when(j < j2)
        def _copy_skip():          # output channels [0, C2): straight copy of x2
            o_ref[...] = x2_ref[...]

        @pl.when(j >= j2)
        def _upsample():           # output channels [C2, C2+C1): MXU GEMM
            o_ref[0] = jnp.dot(
                x1_ref[0], wk_ref[...], preferred_element_type=jnp.float32
            ).astype(o_ref.dtype)

    return kernel


def _make_fused_sep_kernel(j2: int, hin: int, unroll: int):
    """Fused concat + upsample; large spatial maps (separable two-GEMM form)."""

    def kernel(x2_ref, x1_ref, wwpt_ref, whp_ref, o_ref, y_ref):
        j = pl.program_id(1)

        @pl.when(j < j2)
        def _copy_skip():
            o_ref[...] = x2_ref[...]

        @pl.when(j >= j2)
        def _upsample():
            # W-interp hoisted to ONE GEMM over all cb channels: x1 arrives
            # pre-collapsed as (cb*Hin, Win) so no in-kernel reshape is needed.
            y_ref[...] = jnp.dot(
                x1_ref[0], wwpt_ref[...], preferred_element_type=jnp.float32
            ).astype(y_ref.dtype)
            cb = o_ref.shape[1]

            def body(c, carry):
                yc = y_ref[pl.ds(c * hin, hin), :]              # (Hin, W2)
                o_ref[0, c] = jnp.dot(
                    whp_ref[...], yc, preferred_element_type=jnp.float32
                ).astype(o_ref.dtype)
                return carry

            lax.fori_loop(0, cb, body, 0, unroll=unroll)

    return kernel


def _kron_kernel(x_ref, wk_ref, o_ref):
    """Standalone upsample (fallback), small spatial maps."""
    o_ref[...] = jnp.dot(
        x_ref[...], wk_ref[...], preferred_element_type=jnp.float32
    ).astype(o_ref.dtype)


def _make_sep_kernel(hin: int, unroll: int):
    """Standalone upsample (fallback), large spatial maps."""

    def kernel(x_ref, wwpt_ref, whp_ref, o_ref, y_ref):
        y_ref[...] = jnp.dot(
            x_ref[...], wwpt_ref[...], preferred_element_type=jnp.float32
        ).astype(y_ref.dtype)
        cb = o_ref.shape[0]

        def body(c, carry):
            yc = y_ref[pl.ds(c * hin, hin), :]
            o_ref[c] = jnp.dot(
                whp_ref[...], yc, preferred_element_type=jnp.float32
            ).astype(o_ref.dtype)
            return carry

        lax.fori_loop(0, cb, body, 0, unroll=unroll)

    return kernel


# ---------------------------------------------------------------------------
# Wrappers.
# ---------------------------------------------------------------------------
def _up_fused(x1, x2, whp, wwp, use_kron, budget, vmem_limit):
    """Single pallas_call producing the concatenated (N, C1+C2, H2, W2) output."""
    N, C1, Hin, Win = x1.shape
    _, C2, H2, W2 = x2.shape
    dtype = x1.dtype
    isz = dtype.itemsize
    hw_in, hw_out = Hin * Win, H2 * W2
    C = C1 + C2

    if use_kron:
        wk = jnp.asarray(np.kron(whp, wwp).T, dtype=dtype)          # (hw_in, hw_out)
        fixed = _round_up(hw_in, 8) * _round_up(hw_out, 128) * isz  # single-buffered
        per_ch = (4 * _round_up(hw_out, 128) + 2 * _round_up(hw_in, 128)) * isz
        cb = _largest_div_mult8(C2, (budget - fixed) // per_ch)
        j2 = C2 // cb
        j1 = pl.cdiv(C1, cb)

        x2v = x1.reshape  # placeholder to keep linters quiet (overwritten below)
        x2v = x2.reshape(N, C2, hw_out)
        x1v = x1.reshape(N, C1, hw_in)

        kernel = _make_fused_kron_kernel(j2)
        in_specs = [
            pl.BlockSpec((1, cb, hw_out), lambda n, j: (n, jnp.minimum(j, j2 - 1), 0)),
            pl.BlockSpec((1, cb, hw_in), lambda n, j: (n, jnp.maximum(j - j2, 0), 0)),
            _weight_spec((hw_in, hw_out), lambda n, j: (0, 0)),
        ]
        args = (x2v, x1v, wk)
        out_shape = jax.ShapeDtypeStruct((N, C, hw_out), dtype)
        out_spec = pl.BlockSpec((1, cb, hw_out), lambda n, j: (n, j, 0))
        scratch = []
        flops = 2 * N * C1 * hw_in * hw_out
    else:
        whp_j = jnp.asarray(whp, dtype=dtype)       # (H2, Hin)
        wwpt_j = jnp.asarray(wwp.T, dtype=dtype)    # (Win, W2)
        fixed = (_round_up(H2, 8) * _round_up(Hin, 128)
                 + _round_up(Win, 8) * _round_up(W2, 128)) * isz
        per_ch = (4 * _round_up(H2, 8) * _round_up(W2, 128)
                  + 2 * Hin * _round_up(Win, 128)
                  + Hin * _round_up(W2, 128)) * isz
        cb = _largest_div_mult8(C2, min((budget - fixed) // per_ch, _SEP_CB_MAX))
        j2 = C2 // cb
        j1 = pl.cdiv(C1, cb)

        # Collapse (C1, Hin) -> C1*Hin so the whole channel block feeds ONE GEMM
        # (block rows cb*Hin are always a multiple of 8 since cb is).
        x1v = x1.reshape(N, C1 * Hin, Win)

        kernel = _make_fused_sep_kernel(j2, Hin, _H_LOOP_UNROLL)
        in_specs = [
            pl.BlockSpec((1, cb, H2, W2), lambda n, j: (n, jnp.minimum(j, j2 - 1), 0, 0)),
            pl.BlockSpec((1, cb * Hin, Win), lambda n, j: (n, jnp.maximum(j - j2, 0), 0)),
            _weight_spec((Win, W2), lambda n, j: (0, 0)),
            _weight_spec((H2, Hin), lambda n, j: (0, 0)),
        ]
        args = (x2, x1v, wwpt_j, whp_j)
        out_shape = jax.ShapeDtypeStruct((N, C, H2, W2), dtype)
        out_spec = pl.BlockSpec((1, cb, H2, W2), lambda n, j: (n, j, 0, 0))
        scratch = [pltpu.VMEM((cb * Hin, W2), dtype)]
        flops = 2 * N * C1 * Hin * W2 * (Win + H2)

    bytes_accessed = (x1.size + x2.size + N * C * hw_out) * isz + fixed
    out = pl.pallas_call(
        kernel,
        out_shape=out_shape,
        grid_spec=pltpu.PrefetchScalarGridSpec(
            num_scalar_prefetch=0,
            grid=(N, j2 + j1),
            in_specs=in_specs,
            out_specs=out_spec,
            scratch_shapes=scratch,
        ),
        compiler_params=pltpu.CompilerParams(
            dimension_semantics=("parallel", "parallel"),
            vmem_limit_bytes=vmem_limit),
        cost_estimate=pl.CostEstimate(
            flops=int(flops), transcendentals=0, bytes_accessed=int(bytes_accessed)),
    )(*args)
    return out.reshape(N, C, H2, W2)


def _upsample_only(x1, H2, W2, whp, wwp, use_kron, budget, vmem_limit):
    """Fallback (C2 not 8-aligned): upsample+pad only; concat stays in XLA."""
    N, C1, Hin, Win = x1.shape
    dtype = x1.dtype
    isz = dtype.itemsize
    hw_in, hw_out = Hin * Win, H2 * W2
    NC = N * C1

    if use_kron:
        wk = jnp.asarray(np.kron(whp, wwp).T, dtype=dtype)          # (hw_in, hw_out)
        fixed = _round_up(hw_in, 8) * _round_up(hw_out, 128) * isz
        per_row = (2 * _round_up(hw_out, 128) + 2 * _round_up(hw_in, 128)) * isz
        cb = _pick_cb(NC, per_row, fixed, budget)
        out = pl.pallas_call(
            _kron_kernel,
            out_shape=jax.ShapeDtypeStruct((NC, hw_out), dtype),
            grid_spec=pltpu.PrefetchScalarGridSpec(
                num_scalar_prefetch=0,
                grid=(pl.cdiv(NC, cb),),
                in_specs=[
                    pl.BlockSpec((cb, hw_in), lambda i: (i, 0)),
                    _weight_spec((hw_in, hw_out), lambda i: (0, 0)),
                ],
                out_specs=pl.BlockSpec((cb, hw_out), lambda i: (i, 0)),
            ),
            compiler_params=pltpu.CompilerParams(
                dimension_semantics=("parallel",),
                vmem_limit_bytes=vmem_limit),
            cost_estimate=pl.CostEstimate(
                flops=int(2 * NC * hw_in * hw_out), transcendentals=0,
                bytes_accessed=int(NC * (hw_in + hw_out) * isz + fixed)),
        )(x1.reshape(NC, hw_in), wk)
        return out.reshape(N, C1, H2, W2)

    whp_j = jnp.asarray(whp, dtype=dtype)       # (H2, Hin)
    wwpt_j = jnp.asarray(wwp.T, dtype=dtype)    # (Win, W2)
    fixed = (_round_up(H2, 8) * _round_up(Hin, 128)
             + _round_up(Win, 8) * _round_up(W2, 128)) * isz
    per_row = (2 * _round_up(H2, 8) * _round_up(W2, 128)
               + 2 * Hin * _round_up(Win, 128)
               + Hin * _round_up(W2, 128)) * isz
    cb = min(_pick_cb(NC, per_row, fixed, budget), _SEP_CB_MAX)
    cb = min(cb, NC)
    out = pl.pallas_call(
        _make_sep_kernel(Hin, _H_LOOP_UNROLL),
        out_shape=jax.ShapeDtypeStruct((NC, H2, W2), dtype),
        grid_spec=pltpu.PrefetchScalarGridSpec(
            num_scalar_prefetch=0,
            grid=(pl.cdiv(NC, cb),),
            in_specs=[
                # x1 pre-collapsed to (NC*Hin, Win): one GEMM per block.
                pl.BlockSpec((cb * Hin, Win), lambda i: (i, 0)),
                _weight_spec((Win, W2), lambda i: (0, 0)),
                _weight_spec((H2, Hin), lambda i: (0, 0)),
            ],
            out_specs=pl.BlockSpec((cb, H2, W2), lambda i: (i, 0, 0)),
            scratch_shapes=[pltpu.VMEM((cb * Hin, W2), dtype)],
        ),
        compiler_params=pltpu.CompilerParams(
            dimension_semantics=("parallel",),
            vmem_limit_bytes=vmem_limit),
        cost_estimate=pl.CostEstimate(
            flops=int(2 * NC * Hin * W2 * (Win + H2)), transcendentals=0,
            bytes_accessed=int(NC * (hw_in + hw_out) * isz + fixed)),
    )(x1.reshape(NC * Hin, Win), wwpt_j, whp_j)
    return out.reshape(N, C1, H2, W2)


def up_forward(x1: jax.Array, x2: jax.Array) -> jax.Array:
    """Pallas equivalent of Up.forward (bilinear 2x upsample + pad + concat)."""
    N, C1, Hin, Win = x1.shape
    N2, C2, H2, W2 = x2.shape
    assert N == N2, "batch dims must match"
    assert x1.dtype == x2.dtype, "dtypes must match"
    dtype = x1.dtype
    isz = dtype.itemsize

    Hout, Wout = 2 * Hin, 2 * Win
    pad_top = (H2 - Hout) // 2      # floor division == torch.div(..., 'floor')
    pad_left = (W2 - Wout) // 2

    # Pad / crop fused into the interpolation weights (zero rows at pad rows).
    whp = _placed_interp_matrix(Hin, Hout, H2, pad_top)     # (H2, Hin)
    wwp = _placed_interp_matrix(Win, Wout, W2, pad_left)    # (W2, Win)

    hw_in = Hin * Win
    gate = _KRON_HW_IN_MAX_F32 if isz >= 4 else _KRON_HW_IN_MAX_BF16
    use_kron = hw_in <= gate

    vmem_limit = _vmem_limit_bytes()
    budget = int(vmem_limit * 0.8)   # headroom for compiler-internal scratch

    if C2 % 8 == 0:
        # Fused path: one kernel emits the concatenated result directly.
        return _up_fused(x1, x2, whp, wwp, use_kron, budget, vmem_limit)

    # Fallback: x2's channel count cannot align with 8-row output blocks, so the
    # concat cannot be expressed in the out_spec; keep it as one XLA copy.
    x1p = _upsample_only(x1, H2, W2, whp, wwp, use_kron, budget, vmem_limit)
    return jnp.concatenate([x2, x1p], axis=1)


# ---------------------------------------------------------------------------
# Pure-JAX reference and tests.
# ---------------------------------------------------------------------------
def _ref_up_forward(x1, x2):
    """Pure-JAX reference: einsum upsample + jnp.pad + concat (f32)."""
    N, C, Hin, Win = x1.shape
    H2, W2 = x2.shape[2], x2.shape[3]
    Hout, Wout = 2 * Hin, 2 * Win
    wh = jnp.asarray(_interp_matrix(Hin, Hout))
    ww = jnp.asarray(_interp_matrix(Win, Wout))
    up = jnp.einsum("oh,nchw,pw->ncop", wh, x1, ww)
    dy, dx = H2 - Hout, W2 - Wout
    pt, plft = dy // 2, dx // 2
    up = jnp.pad(up, ((0, 0), (0, 0), (pt, dy - pt), (plft, dx - plft)))
    return jnp.concatenate([x2, up], axis=1)


if __name__ == "__main__":
    key = jax.random.PRNGKey(0)
    ks = jax.random.split(key, 12)
    up = jax.jit(up_forward)

    def check(a1, a2, rtol=1e-4, atol=1e-4):
        out = jax.block_until_ready(up(a1, a2))
        ref = _ref_up_forward(a1.astype(jnp.float32), a2.astype(jnp.float32))
        np.testing.assert_allclose(np.asarray(out, dtype=np.float32),
                                   np.asarray(ref), rtol=rtol, atol=atol)
        return out

    # 1) Fused path, kron GEMM, exact 2x (no pad), C1 == C2.
    x1 = jax.random.normal(ks[0], (2, 8, 8, 8), jnp.float32)
    x2 = jax.random.normal(ks[1], (2, 8, 16, 16), jnp.float32)
    assert check(x1, x2).shape == (2, 16, 16, 16)

    # 2) Fused kron, asymmetric pad, C1 != C2, partial last channel block
    #    (C1 % cb != 0 -> exercises masked edge-block stores).
    x1 = jax.random.normal(ks[2], (2, 12, 8, 8), jnp.float32)
    x2 = jax.random.normal(ks[3], (2, 8, 19, 17), jnp.float32)
    assert check(x1, x2).shape == (2, 20, 19, 17)

    # 3) Fused path, separable form (hw_in above the kron gate), with pad.
    x1 = jax.random.normal(ks[4], (1, 8, 24, 24), jnp.float32)
    x2 = jax.random.normal(ks[5], (1, 8, 49, 48), jnp.float32)
    assert check(x1, x2).shape == (1, 16, 49, 48)

    # 4) Fallback (C2 % 8 != 0): standalone kron kernel + XLA concat.
    x1 = jax.random.normal(ks[6], (2, 4, 8, 8), jnp.float32)
    x2 = jax.random.normal(ks[7], (2, 4, 16, 16), jnp.float32)
    assert check(x1, x2).shape == (2, 8, 16, 16)

    # 5) Fallback separable, NC < 8 (exercises the cb <= NC clamp).
    x1 = jax.random.normal(ks[8], (1, 3, 20, 20), jnp.float32)
    x2 = jax.random.normal(ks[9], (1, 3, 41, 40), jnp.float32)
    assert check(x1, x2).shape == (1, 6, 41, 40)

    # 6) bf16 activations on the fused kron path (looser tolerance).
    x1 = jax.random.normal(ks[10], (2, 8, 8, 8), jnp.float32).astype(jnp.bfloat16)
    x2 = jax.random.normal(ks[11], (2, 8, 16, 16), jnp.float32).astype(jnp.bfloat16)
    assert check(x1, x2, rtol=5e-2, atol=5e-2).shape == (2, 16, 16, 16)

    print("KERNEL_OK")
</pallas_src>

<mosaic_0001>
module attributes {stable_mosaic.version = 11 : i64} {
  func.func @kernel(%arg0: i32, %arg1: i32, %arg2: memref<1x8x256xf32, #tpu.memory_space<vmem>>, %arg3: memref<1x8x64xf32, #tpu.memory_space<vmem>>, %arg4: memref<64x256xf32, #tpu.memory_space<vmem>>, %arg5: memref<1x8x256xf32, #tpu.memory_space<vmem>>) attributes {dimension_semantics = [#tpu.dimension_semantics<parallel>, #tpu.dimension_semantics<parallel>], iteration_bounds = array<i64: 2, 2>, scalar_prefetch = 0 : i64, scratch_operands = 0 : i64, tpu.core_type = #tpu.core_type<tc>, window_params = [{transform_indices = @transform_0, window_bounds = array<i64: 1, 8, 256>}, {transform_indices = @transform_1, window_bounds = array<i64: 1, 8, 64>}, {pipeline_mode = #tpu.pipeline_mode<synchronous>, transform_indices = @transform_2, window_bounds = array<i64: 64, 256>}, {transform_indices = @transform_3, window_bounds = array<i64: 1, 8, 256>}]} {
    %c1_i32 = arith.constant 1 : i32
    %0 = arith.cmpi slt, %arg1, %c1_i32 : i32
    %1 = arith.extui %0 : i1 to i32
    %c0_i32 = arith.constant 0 : i32
    %2 = arith.cmpi ne, %1, %c0_i32 : i32
    scf.if %2 {
      %c0 = arith.constant 0 : index
      %c0_2 = arith.constant 0 : index
      %c0_3 = arith.constant 0 : index
      %6 = vector.load %arg2[%c0, %c0_2, %c0_3] : memref<1x8x256xf32, #tpu.memory_space<vmem>>, vector<1x8x256xf32>
      %c0_4 = arith.constant 0 : index
      %c0_5 = arith.constant 0 : index
      %c0_6 = arith.constant 0 : index
      %7 = vector.load %arg5[%c0_4, %c0_5, %c0_6] : memref<1x8x256xf32, #tpu.memory_space<vmem>>, vector<1x8x256xf32>
      tpu.vector_store %arg5[%c0_4, %c0_5, %c0_6], %6 {strides = array<i32>} : memref<1x8x256xf32, #tpu.memory_space<vmem>>, vector<1x8x256xf32>,
    } else {
    }
    %c1_i32_0 = arith.constant 1 : i32
    %3 = arith.cmpi sge, %arg1, %c1_i32_0 : i32
    %4 = arith.extui %3 : i1 to i32
    %c0_i32_1 = arith.constant 0 : i32
    %5 = arith.cmpi ne, %4, %c0_i32_1 : i32
    scf.if %5 {
      %c0 = arith.constant 0 : index
      %c0_2 = arith.constant 0 : index
      %c0_3 = arith.constant 0 : index
      %6 = vector.load %arg3[%c0, %c0_2, %c0_3] : memref<1x8x64xf32, #tpu.memory_space<vmem>>, vector<1x8x64xf32>
      %7 = vector.shape_cast %6 : vector<1x8x64xf32> to vector<8x64xf32>
      %c0_4 = arith.constant 0 : index
      %c0_5 = arith.constant 0 : index
      %8 = vector.load %arg4[%c0_4, %c0_5] : memref<64x256xf32, #tpu.memory_space<vmem>>, vector<64x256xf32>
      %cst = arith.constant dense<0.000000e+00> : vector<8x256xf32>
      %9 = tpu.matmul %7, %8, %cst {dimension_numbers = #tpu.dot_dimension_numbers<[1], [0], [0], [1], [0, 0, 1, 1], [], []>} : vector<8x64xf32>, vector<64x256xf32>, vector<8x256xf32> -> vector<8x256xf32>
      %c0_6 = arith.constant 0 : index
      %c0_7 = arith.constant 0 : index
      %c0_8 = arith.constant 0 : index
      %10 = vector.load %arg5[%c0_6, %c0_7, %c0_8] : memref<1x8x256xf32, #tpu.memory_space<vmem>>, vector<1x8x256xf32>
      %11 = vector.shape_cast %10 : vector<1x8x256xf32> to vector<8x256xf32>
      %12 = vector.shape_cast %9 : vector<8x256xf32> to vector<1x8x256xf32>
      tpu.vector_store %arg5[%c0_6, %c0_7, %c0_8], %12 {strides = array<i32>} : memref<1x8x256xf32, #tpu.memory_space<vmem>>, vector<1x8x256xf32>,
    } else {
    }
    return
  }
  func.func @transform_0(%arg0: i32, %arg1: i32) -> (i32, i32, i32) {
    %c0_i32 = arith.constant 0 : i32
    %0 = arith.minsi %arg1, %c0_i32 : i32
    %c0_i32_0 = arith.constant 0 : i32
    %c0_i32_1 = arith.constant 0 : i32
    return %arg0, %0, %c0_i32_0 : i32, i32, i32
  }
  func.func @transform_1(%arg0: i32, %arg1: i32) -> (i32, i32, i32) {
    %c1_i32 = arith.constant 1 : i32
    %0 = arith.subi %arg1, %c1_i32 : i32
    %c0_i32 = arith.constant 0 : i32
    %1 = arith.maxsi %0, %c0_i32 : i32
    %c0_i32_0 = arith.constant 0 : i32
    %c0_i32_1 = arith.constant 0 : i32
    return %arg0, %1, %c0_i32_0 : i32, i32, i32
  }
  func.func @transform_2(%arg0: i32, %arg1: i32) -> (i32, i32) {
    %c0_i32 = arith.constant 0 : i32
    %c0_i32_0 = arith.constant 0 : i32
    %c0_i32_1 = arith.constant 0 : i32
    return %c0_i32, %c0_i32_0 : i32, i32
  }
  func.func @transform_3(%arg0: i32, %arg1: i32) -> (i32, i32, i32) {
    %c0_i32 = arith.constant 0 : i32
    %c0_i32_0 = arith.constant 0 : i32
    return %arg0, %arg1, %c0_i32 : i32, i32, i32
  }
}

</mosaic_0001>

<llo_original>
// kernel: up_forward.1
$region0: #{up_forward.1}
  #allocation0 [shape = 'u32[]', space=smem, size = 0x4, offset = 0x4, fixed_abs, tag = 'smem constant byte address 0x4 - core index']
  #allocation1 [shape = 'u32[144,128]{1,0:T(1,128)}', space=vmem, size = 0x12000, scoped, tag = 'internal scratch']
  %s0 = inlined_call_operand.vmem [shape: f32[2,8,256], index: 0, kind: input, shape index: {}]
  %s1 = inlined_call_operand.vmem [shape: f32[2,8,64], index: 1, kind: input, shape index: {}]
  %s2 = inlined_call_operand.vmem [shape: f32[64,256], index: 2, kind: input, shape index: {}]
  %s3 = inlined_call_operand.vmem [shape: f32[2,16,256], index: 3, kind: output, shape index: {}]
  %s4 = sld [smem:[#allocation0]]
  $region53: #{up_forward.1} parent=0
    _
  %s6 = ssub.s32 1, %s4
  %s7 = scalar_select 0, %s6, %s4
  loop: start=0, step=1, limit=6
  $region2: #{up_forward.1} parent=0 // loop_pre_header
    _
  $region3: #{up_forward.1} parent=0 // loop_header
    %s9 = sphi 0, %s13
    %p10 = scmp.ge.s32.totalorder %s9, 6
    %s16 = sphi 0, %s28
    %s17 = sphi 0, %s24
    %s18 = sphi 0, %s16
    %s19 = sphi 0, %s17
    %s20 = sphi 0, %s18
    %s21 = sphi 0, %s19
    %s37 = sphi 0, %s39
    %s40 = sphi 0, %s37
    %s41 = sphi 0, %s40
    %s57 = sphi 0, %s41
    %s71 = sphi 0, %s73
    %s74 = sphi 0, %s71
    %s75 = sphi 0, %s74
    %s91 = sphi 0, %s75
    %s95 = sphi 0, %s95
    %s97 = sphi 0, %s95
    %s98 = sphi 0, %s97
    %s112 = sphi 0, %s98
    %s120 = sphi 0, %s122
    %s123 = sphi 0, %s120
    %s124 = sphi 0, %s123
    %s140 = sphi 0, %s124
  $region4: #{up_forward.1} parent=0 // loop_header_branch
    %12 = sbr.rel (%p10) target = $region8
  $region5: #{up_forward.1} parent=0 // loop_body
    %s14 = ssub.s32 %s9, 1
    %s15 = ssub.s32 %s9, 2
    %s22 = sadd.s32 1, %s17
    %p23 = scmp.ge.s32.totalorder %s22, 2
    %s24 = scalar_select %p23, 0, %s22
    %s25 = sadd.s32 1, %s16
    %s26 = scalar_select %p23, %s25, %s16
    %p27 = scmp.ge.s32.totalorder %s26, 2
    %s28 = scalar_select %p27, 0, %s26
    %p29 = scmp.lt.s32.totalorder %s17, 0
    %s30 = scalar_select %p29, %s17, 0
    %p31 = scmp.lt.s32.totalorder %s24, 0
    %s32 = scalar_select %p31, %s24, 0
    %s33 = ssub.s32 %s16, %s28
    %s34 = ssub.s32 %s30, %s32
    %s35 = sor.u32 %s33, %s34
    %p36 = scmp.eq.s32.totalorder %s35, 0
    %s38 = sadd.s32 %s37, 1
    %s39 = scalar_select %p36, %s37, %s38
    %p42 = pneg %p36
    %p43 = scmp.eq.s32.totalorder %s9, 3
    %p44 = por %p42, %p43
    %p45 = scmp.ne.s32.totalorder %s37, %s40
    %p46 = scmp.eq.s32.totalorder %s9, 0
    %p47 = por %p45, %p46
    %p48 = scmp.ne.s32.totalorder %s37, %s40
    %p49 = scmp.eq.s32.totalorder %s14, 3
    %p50 = por %p48, %p49
    %p51 = scmp.ne.s32.totalorder %s40, %s41
    %p52 = scmp.eq.s32.totalorder %s14, 0
    %p53 = por %p51, %p52
    %p54 = scmp.ne.s32.totalorder %s40, %s41
    %p55 = scmp.eq.s32.totalorder %s15, 3
    %p56 = por %p54, %p55
    %p58 = scmp.ne.s32.totalorder %s41, %s57
    %p59 = scmp.eq.s32.totalorder %s15, 0
    %p60 = por %p58, %p59
    %s61 = ssub.s32 %s17, 1
    %p62 = scmp.gt.s32.totalorder %s61, 0
    %s63 = scalar_select %p62, %s61, 0
    %s64 = ssub.s32 %s24, 1
    %p65 = scmp.gt.s32.totalorder %s64, 0
    %s66 = scalar_select %p65, %s64, 0
    %s67 = ssub.s32 %s16, %s28
    %s68 = ssub.s32 %s63, %s66
    %s69 = sor.u32 %s67, %s68
    %p70 = scmp.eq.s32.totalorder %s69, 0
    %s72 = sadd.s32 %s71, 1
    %s73 = scalar_select %p70, %s71, %s72
    %p76 = pneg %p70
    %p77 = scmp.eq.s32.totalorder %s9, 3
    %p78 = por %p76, %p77
    %p79 = scmp.ne.s32.totalorder %s71, %s74
    %p80 = scmp.eq.s32.totalorder %s9, 0
    %p81 = por %p79, %p80
    %p82 = scmp.ne.s32.totalorder %s71, %s74
    %p83 = scmp.eq.s32.totalorder %s14, 3
    %p84 = por %p82, %p83
    %p85 = scmp.ne.s32.totalorder %s74, %s75
    %p86 = scmp.eq.s32.totalorder %s14, 0
    %p87 = por %p85, %p86
    %p88 = scmp.ne.s32.totalorder %s74, %s75
    %p89 = scmp.eq.s32.totalorder %s15, 3
    %p90 = por %p88, %p89
    %p92 = scmp.ne.s32.totalorder %s75, %s91
    %p93 = scmp.eq.s32.totalorder %s15, 0
    %p94 = por %p92, %p93
    %s96 = sadd.s32 %s95, 1
    %p99 = scmp.eq.s32.totalorder %s9, 3
    %p100 = scmp.ne.s32.totalorder %s95, %s97
    %p101 = scmp.eq.s32.totalorder %s9, 0
    %p102 = por %p100, %p101
    %p103 = scmp.ne.s32.totalorder %s95, %s97
    %p104 = scmp.eq.s32.totalorder %s14, 3
    %p105 = por %p103, %p104
    %p106 = scmp.ne.s32.totalorder %s97, %s98
    %p107 = scmp.eq.s32.totalorder %s14, 0
    %p108 = por %p106, %p107
    %p109 = scmp.ne.s32.totalorder %s97, %s98
    %p110 = scmp.eq.s32.totalorder %s15, 3
    %p111 = por %p109, %p110
    %p113 = scmp.ne.s32.totalorder %s98, %s112
    %p114 = scmp.eq.s32.totalorder %s15, 0
    %p115 = por %p113, %p114
    %s116 = ssub.s32 %s16, %s28
    %s117 = ssub.s32 %s17, %s24
    %s118 = sor.u32 %s116, %s117
    %p119 = scmp.eq.s32.totalorder %s118, 0
    %s121 = sadd.s32 %s120, 1
    %s122 = scalar_select %p119, %s120, %s121
    %p125 = pneg %p119
    %p126 = scmp.eq.s32.totalorder %s9, 3
    %p127 = por %p125, %p126
    %p128 = scmp.ne.s32.totalorder %s120, %s123
    %p129 = scmp.eq.s32.totalorder %s9, 0
    %p130 = por %p128, %p129
    %p131 = scmp.ne.s32.totalorder %s120, %s123
    %p132 = scmp.eq.s32.totalorder %s14, 3
    %p133 = por %p131, %p132
    %p134 = scmp.ne.s32.totalorder %s123, %s124
    %p135 = scmp.eq.s32.totalorder %s14, 0
    %p136 = por %p134, %p135
    %p137 = scmp.ne.s32.totalorder %s123, %s124
    %p138 = scmp.eq.s32.totalorder %s15, 3
    %p139 = por %p137, %p138
    %p141 = scmp.ne.s32.totalorder %s124, %s140
    %p142 = scmp.eq.s32.totalorder %s15, 0
    %p143 = por %p141, %p142
    %p144 = scmp.le.s32.totalorder 1, %s9
    %p145 = scmp.lt.s32.totalorder %s9, 5
    %p146 = pnand %p144, %p145
    %p147 = pneg %p146
    // Predicated region
    $region9: #{up_forward.1} parent=5 // pred_check
      _
    $region10: #{up_forward.1} parent=5 // pred_check_branch
      %149 = sbr.rel (%p146) target = $region12
    $region11: #{up_forward.1} parent=5 // pred_region
      %s150 = ssub.s32 %s9, 1
      // Predicated region
      $region13: #{up_forward.1} parent=11 // pred_check
        %p151 = pneg %p108
      $region14: #{up_forward.1} parent=11 // pred_check_branch
        %153 = sbr.rel (%p151) target = $region16
      $region15: #{up_forward.1} parent=11 // pred_region
        _
      $region16: #{up_forward.1} parent=11 // pred_fallthru
        _
    $region12: #{up_forward.1} parent=5 // pred_fallthru
      _
    %p154 = scmp.lt.s32.totalorder %s9, 4
    // Predicated region
    $region17: #{up_forward.1} parent=5 // pred_check
      %p155 = pneg %p154
    $region18: #{up_forward.1} parent=5 // pred_check_branch
      %157 = sbr.rel (%p155) target = $region20
    $region19: #{up_forward.1} parent=5 // pred_region
      // Predicated region
      $region21: #{up_forward.1} parent=19 // pred_check
        %p158 = pneg %p47
      $region22: #{up_forward.1} parent=19 // pred_check_branch
        %160 = sbr.rel (%p158) target = $region24
      $region23: #{up_forward.1} parent=19 // pred_region
        %p161 = scmp.lt.s32.totalorder %s17, 0
        %s162 = scalar_select %p161, %s17, 0
        %p163 = scmp.lt.s32.totalorder %s16, 1
        %s164 = scalar_select %p163, %s16, 1
        %p165 = scmp.lt.s32.totalorder %s162, 0
        %s166 = scalar_select %p165, %s162, 0
        %s167 = smul.addr %s166, 2
        %s168 = smul.addr %s164, 2
        %s169 = sadd.s32 %s167, %s168
        %s170 = smul.addr %s169, 8
        %s171 = scalar_lea.vmem %s0, %s170
        %p172 = scmp.lt.s32.totalorder %s17, 0
        %s173 = scalar_select %p172, %s17, 0
      $region24: #{up_forward.1} parent=19 // pred_fallthru
        _
      // Predicated region
      $region25: #{up_forward.1} parent=19 // pred_check
        %p174 = pneg %p81
      $region26: #{up_forward.1} parent=19 // pred_check_branch
        %176 = sbr.rel (%p174) target = $region28
      $region27: #{up_forward.1} parent=19 // pred_region
        %s177 = ssub.s32 %s17, 1
        %p178 = scmp.gt.s32.totalorder %s177, 0
        %s179 = scalar_select %p178, %s177, 0
        %p180 = scmp.lt.s32.totalorder %s16, 1
        %s181 = scalar_select %p180, %s16, 1
        %p182 = scmp.lt.s32.totalorder %s179, 0
        %s183 = scalar_select %p182, %s179, 0
        %s184 = sadd.s32 %s183, %s181
        %s185 = smul.addr %s184, 8
        %s186 = scalar_lea.vmem %s1, %s185
        %s187 = ssub.s32 %s17, 1
        %p188 = scmp.gt.s32.totalorder %s187, 0
        %s189 = scalar_select %p188, %s187, 0
      $region28: #{up_forward.1} parent=19 // pred_fallthru
        _
    $region20: #{up_forward.1} parent=5 // pred_fallthru
      _
    %p190 = scmp.le.s32.totalorder 1, %s9
    %p191 = scmp.lt.s32.totalorder %s9, 5
    %p192 = pnand %p190, %p191
    %p193 = pneg %p192
    // Predicated region
    $region29: #{up_forward.1} parent=5 // pred_check
      _
    $region30: #{up_forward.1} parent=5 // pred_check_branch
      %195 = sbr.rel (%p192) target = $region32
    $region31: #{up_forward.1} parent=5 // pred_region
      %s196 = ssub.s32 %s9, 1
      %p197 = scmp.lt.s32.totalorder %s19, 0
      %s198 = scalar_select %p197, %s19, 0
      %p199 = scmp.lt.s32.totalorder %s18, 1
      %s200 = scalar_select %p199, %s18, 1
      %p201 = scmp.lt.s32.totalorder %s198, 0
      %s202 = scalar_select %p201, %s198, 0
      %s203 = smul.addr %s202, 2
      %s204 = smul.addr %s200, 2
      %s205 = sadd.s32 %s203, %s204
      %s206 = smul.addr %s205, 8
      %s207 = scalar_lea.vmem %s0, %s206
      %p208 = pneg %p53
      %p209 = pneg %p50
      %s210 = ssub.s32 %s19, 1
      %p211 = scmp.gt.s32.totalorder %s210, 0
      %s212 = scalar_select %p211, %s210, 0
      %p213 = scmp.lt.s32.totalorder %s18, 1
      %s214 = scalar_select %p213, %s18, 1
      %p215 = scmp.lt.s32.totalorder %s212, 0
      %s216 = scalar_select %p215, %s212, 0
      %s217 = sadd.s32 %s216, %s214
      %s218 = smul.addr %s217, 8
      %s219 = scalar_lea.vmem %s1, %s218
      %p220 = pneg %p87
      %p221 = pneg %p84
      %p222 = pneg %p108
      %p223 = pneg %p105
      %p224 = pneg %p136
      %p225 = pneg %p133
      %p226 = scmp.lt.s32.totalorder %s18, 1
      %s227 = scalar_select %p226, %s18, 1
      %p228 = scmp.lt.s32.totalorder %s19, 1
      %s229 = scalar_select %p228, %s19, 1
      %s230 = smul.addr %s229, 2
      %s231 = smul.addr %s227, 4
      %s232 = sadd.s32 %s230, %s231
      %s233 = smul.addr %s232, 8
      %s234 = scalar_lea.vmem %s3, %s233
      %p235 = scmp.lt.s32.totalorder %s19, 0
      %s236 = scalar_select %p235, %s19, 0
      %p237 = scmp.lt.s32.totalorder %s18, 1
      %s238 = scalar_select %p237, %s18, 1
      %p239 = scmp.lt.s32.totalorder %s236, 0
      %s240 = scalar_select %p239, %s236, 0
      %s241 = smul.addr %s240, 2
      %s242 = smul.addr %s238, 2
      %s243 = sadd.s32 %s241, %s242
      %s244 = smul.addr %s243, 8
      %s245 = scalar_lea.vmem %s0, %s244
      %p246 = scmp.lt.s32.totalorder %s19, 0
      %s247 = scalar_select %p246, %s19, 0
      %s248 = ssub.s32 %s19, 1
      %p249 = scmp.gt.s32.totalorder %s248, 0
      %s250 = scalar_select %p249, %s248, 0
      %p251 = scmp.lt.s32.totalorder %s18, 1
      %s252 = scalar_select %p251, %s18, 1
      %p253 = scmp.lt.s32.totalorder %s250, 0
      %s254 = scalar_select %p253, %s250, 0
      %s255 = sadd.s32 %s254, %s252
      %s256 = smul.addr %s255, 8
      %s257 = scalar_lea.vmem %s1, %s256
      %s258 = ssub.s32 %s19, 1
      %p259 = scmp.gt.s32.totalorder %s258, 0
      %s260 = scalar_select %p259, %s258, 0
      %p261 = scmp.lt.s32.totalorder %s18, 1
      %s262 = scalar_select %p261, %s18, 1
      %p263 = scmp.lt.s32.totalorder %s19, 1
      %s264 = scalar_select %p263, %s19, 1
      %s265 = smul.addr %s264, 2
      %s266 = smul.addr %s262, 4
      %s267 = sadd.s32 %s265, %s266
      %s268 = smul.addr %s267, 8
      %s269 = scalar_lea.vmem %s3, %s268
      %p270 = scmp.lt.s32.totalorder %s19, 1
      // Predicated region
      $region33: #{up_forward.1} parent=31 // pred_check
        %p271 = pneg %p270
      $region34: #{up_forward.1} parent=31 // pred_check_branch
        %273 = sbr.rel (%p271) target = $region36
      $region35: #{up_forward.1} parent=31 // pred_region
        %v274 = vld [vmem:[%s245] sm:$0xff]
        %v275 = vld [vmem:[%s245 + $0x8] sm:$0xff]
        %276 = vst [vmem:[%s269] sm:$0xff] %v274
        %277 = vst [vmem:[%s269 + $0x8] sm:$0xff] %v275
      $region36: #{up_forward.1} parent=31 // pred_fallthru
        _
      %p278 = scmp.ge.s32.totalorder %s19, 1
      // Predicated region
      $region37: #{up_forward.1} parent=31 // pred_check
        %p279 = pneg %p278
      $region38: #{up_forward.1} parent=31 // pred_check_branch
        %281 = sbr.rel (%p279) target = $region40
      $region39: #{up_forward.1} parent=31 // pred_region
        %v282 = vld [vmem:[%s257] sm:$0xff]
        %v283 = vld [vmem:[%s2] sm:$0xff]
        %v284 = vld [vmem:[%s2 + $0x8] sm:$0xff]
        %v285 = vld [vmem:[%s2 + $0x10] sm:$0xff]
        %v286 = vld [vmem:[%s2 + $0x18] sm:$0xff]
        %v287 = vld [vmem:[%s2 + $0x20] sm:$0xff]
        %v288 = vld [vmem:[%s2 + $0x28] sm:$0xff]
        %v289 = vld [vmem:[%s2 + $0x30] sm:$0xff]
        %v290 = vld [vmem:[%s2 + $0x38] sm:$0xff]
        %v291 = vld [vmem:[%s2 + $0x40] sm:$0xff]
        %v292 = vld [vmem:[%s2 + $0x48] sm:$0xff]
        %v293 = vld [vmem:[%s2 + $0x50] sm:$0xff]
        %v294 = vld [vmem:[%s2 + $0x58] sm:$0xff]
        %v295 = vld [vmem:[%s2 + $0x60] sm:$0xff]
        %v296 = vld [vmem:[%s2 + $0x68] sm:$0xff]
        %v297 = vld [vmem:[%s2 + $0x70] sm:$0xff]
        %v298 = vld [vmem:[%s2 + $0x78] sm:$0xff]
        %vm299 = vcmask 523264
        %v301 = vsel %vm299, %v282, 0
        %303 = vmatprep.subr.mxu0 0.0
        %304 = vmatpush1.msra.mxu0 0.0
        %305 = vmatprep.subr.mxu0 0.0
        %306 = vmatpush1.msra.mxu0 0.0
        %307 = vmatprep.subr.mxu0 0.0
        %308 = vmatpush1.msra.mxu0 0.0
        %309 = vmatprep.subr.mxu0 0.0
        %310 = vmatpush1.msra.mxu0 0.0
        %311 = vmatprep.subr.mxu0 0.0
        %312 = vmatpush1.msra.mxu0 0.0
        %313 = vmatprep.subr.mxu0 0.0
        %314 = vmatpush1.msra.mxu0 0.0
        %315 = vmatprep.subr.mxu0 0.0
        %316 = vmatpush1.msra.mxu0 0.0
        %317 = vmatprep.subr.mxu0 0.0
        %318 = vmatpush1.msra.mxu0 0.0
        %319 = vmatprep.subr.mxu0 %v298
        %320 = vmatpush1.msra.mxu0 %v297
        %321 = vmatprep.subr.mxu0 %v296
        %322 = vmatpush1.msra.mxu0 %v295
        %323 = vmatprep.subr.mxu0 %v294
        %324 = vmatpush1.msra.mxu0 %v293
        %325 = vmatprep.subr.mxu0 %v292
        %326 = vmatpush1.msra.mxu0 %v291
        %327 = vmatprep.subr.mxu0 %v290
        %328 = vmatpush1.msra.mxu0 %v289
        %329 = vmatprep.subr.mxu0 %v288
        %330 = vmatpush1.msra.mxu0 %v287
        %331 = vmatprep.subr.mxu0 %v286
        %332 = vmatpush1.msra.mxu0 %v285
        %333 = vmatprep.subr.mxu0 %v284
        %334 = vmatpush1.msra.mxu0 %v283
        %335 = vmatprep.subr.mxu0 0.0
        %336 = vmatpush2.msra.mxu0 0.0
        %337 = vmatprep.subr.mxu0 0.0
        %338 = vmatpush2.msra.mxu0 0.0
        %339 = vmatprep.subr.mxu0 0.0
        %340 = vmatpush2.msra.mxu0 0.0
        %341 = vmatprep.subr.mxu0 0.0
        %342 = vmatpush2.msra.mxu0 0.0
        %343 = vmatprep.subr.mxu0 0.0
        %344 = vmatpush2.msra.mxu0 0.0
        %345 = vmatprep.subr.mxu0 0.0
        %346 = vmatpush2.msra.mxu0 0.0
        %347 = vmatprep.subr.mxu0 0.0
        %348 = vmatpush2.msra.mxu0 0.0
        %349 = vmatprep.subr.mxu0 0.0
        %350 = vmatpush2.msra.mxu0 0.0
        %351 = vmatprep.subr.mxu0 0.0
        %352 = vmatpush2.msra.mxu0 0.0
        %353 = vmatprep.subr.mxu0 0.0
        %354 = vmatpush2.msra.mxu0 0.0
        %355 = vmatprep.subr.mxu0 0.0
        %356 = vmatpush2.msra.mxu0 0.0
        %357 = vmatprep.subr.mxu0 0.0
        %358 = vmatpush2.msra.mxu0 0.0
        %359 = vmatprep.subr.mxu0 0.0
        %360 = vmatpush2.msra.mxu0 0.0
        %361 = vmatprep.subr.mxu0 0.0
        %362 = vmatpush2.msra.mxu0 0.0
        %363 = vmatprep.subr.mxu0 0.0
        %364 = vmatpush2.msra.mxu0 0.0
        %365 = vmatprep.subr.mxu0 0.0
        %366 = vmatpush2.msra.mxu0 0.0
        %367 = vmatprep.mubr.f32.mxu0 0.0
        %368 = vmatmul.mubr.f32.gmra.mxu0 %v301
        %v369 = vpop.f32.mrf.mxu0
        %v370 = vadd.f32 0.0, %v369
        %v371 = vpop.f32.mrf.mxu0
        %v372 = vadd.f32 0.0, %v371
        %373 = vdwg.mxu0
        %374 = vst [vmem:[%s269] sm:$0xff] %v370
        %375 = vst [vmem:[%s269 + $0x8] sm:$0xff] %v372
      $region40: #{up_forward.1} parent=31 // pred_fallthru
        _
      %p376 = scmp.lt.s32.totalorder %s18, 1
      %s377 = scalar_select %p376, %s18, 1
      %p378 = scmp.lt.s32.totalorder %s19, 1
      %s379 = scalar_select %p378, %s19, 1
      %s380 = smul.addr %s379, 2
      %s381 = smul.addr %s377, 4
      %s382 = sadd.s32 %s380, %s381
      %s383 = smul.addr %s382, 8
      %s384 = scalar_lea.vmem %s3, %s383
      // Predicated region
      $region41: #{up_forward.1} parent=31 // pred_check
        %p385 = pneg %p133
      $region42: #{up_forward.1} parent=31 // pred_check_branch
        %387 = sbr.rel (%p385) target = $region44
      $region43: #{up_forward.1} parent=31 // pred_region
        _
      $region44: #{up_forward.1} parent=31 // pred_fallthru
        _
    $region32: #{up_forward.1} parent=5 // pred_fallthru
      _
    %p388 = scmp.le.s32.totalorder 2, %s9
    // Predicated region
    $region45: #{up_forward.1} parent=5 // pred_check
      %p389 = pneg %p388
    $region46: #{up_forward.1} parent=5 // pred_check_branch
      %391 = sbr.rel (%p389) target = $region48
    $region47: #{up_forward.1} parent=5 // pred_region
      %s392 = ssub.s32 %s9, 2
      // Predicated region
      $region49: #{up_forward.1} parent=47 // pred_check
        %p393 = pneg %p139
      $region50: #{up_forward.1} parent=47 // pred_check_branch
        %395 = sbr.rel (%p393) target = $region52
      $region51: #{up_forward.1} parent=47 // pred_region
        %p396 = scmp.lt.s32.totalorder %s20, 1
        %s397 = scalar_select %p396, %s20, 1
        %p398 = scmp.lt.s32.totalorder %s21, 1
        %s399 = scalar_select %p398, %s21, 1
        %s400 = smul.addr %s399, 2
        %s401 = smul.addr %s397, 4
        %s402 = sadd.s32 %s400, %s401
        %s403 = smul.addr %s402, 8
        %s404 = scalar_lea.vmem %s3, %s403
      $region52: #{up_forward.1} parent=47 // pred_fallthru
        _
    $region48: #{up_forward.1} parent=5 // pred_fallthru
      _
  $region6: #{up_forward.1} parent=0 // loop_footer
    %s13 = sadd.s32 1, %s9
  $region7: #{up_forward.1} parent=0 // loop_footer_branch
    %8 = sbr.rel target = $region3
  $region8: #{up_forward.1} parent=0 // loop_exit
    _

</llo_original>
